<compile_context>
chip_gen: v6e
topology: v6e:2x2x1
jax: 0.10.0
libtpu: 0.0.40
codegen_flags: <defaults>
</compile_context>

<pallas_src>
import functools
import math

import numpy as np
import jax
import jax.numpy as jnp
from jax.experimental import pallas as pl
from jax.experimental.pallas import tpu as pltpu


# ----------------------------------------------------------------------------
# Kernel
# ----------------------------------------------------------------------------
def _cosine_pe_kernel(a_ref, b_ref, o_ref, *, block_rows: int, pos_per_row: int):
    """o[r, c] = sin(row_pos[r] * a[c] + b[c]).

    a_ref, b_ref: (1, lane_width) per-lane frequency / bias vectors.
    o_ref:        (block_rows, lane_width) output tile.
    row_pos[r] is the position index of lane 0 of output row r.
    """
    row = jax.lax.broadcasted_iota(jnp.int32, (block_rows, 1), 0)
    row_pos = (pl.program_id(0) * block_rows + row) * pos_per_row
    o_ref[...] = jnp.sin(row_pos.astype(jnp.float32) * a_ref[...] + b_ref[...])


# ----------------------------------------------------------------------------
# Layout / grid selection
# ----------------------------------------------------------------------------
def _choose_layout(d_model: int, max_len: int):
    """Pick a lane-dense 2-D layout (rows, lane_width), rows*lane == table."""
    if d_model % 128 == 0:
        return max_len, d_model                      # already lane-dense
    lane_width = (d_model * 128) // math.gcd(d_model, 128)   # lcm(d_model, 128)
    if lane_width <= 512 and (max_len * d_model) % lane_width == 0:
        return (max_len * d_model) // lane_width, lane_width  # folded, lane-dense
    # Fallback: correct but may use masked stores for d_model % 128 != 0.
    return max_len, d_model


def _num_tensorcores() -> int:
    """Best-effort TensorCore count; 1 (the safe choice) if unknown."""
    try:
        info = pltpu.get_tpu_info()
    except Exception:
        return 1
    for attr in ("num_cores", "core_count", "num_tensorcores",
                 "tensorcore_count", "num_cores_per_chip"):
        n = getattr(info, attr, None)
        if isinstance(n, int) and n > 0:
            return n
    return 1


def _choose_num_blocks(rows: int, lane_width: int, num_cores: int,
                       itemsize: int = 4) -> int:
    """1 block on single-TC chips / tiny tables; size-gated 2-way split on v7x."""
    min_block_bytes = 64 << 10          # don't split tables smaller than this
    budget = 8 << 20                    # 2 * block_bytes (double-buffered out)
    n = 1
    if (num_cores >= 2
            and rows % 2 == 0 and (rows // 2) % 8 == 0
            and lane_width % 128 == 0
            and (rows // 2) * lane_width * itemsize >= min_block_bytes):
        n = 2
    # Keep the double-buffered output block inside the VMEM budget when the
    # divisibility allows; otherwise the explicit vmem_limit below covers it.
    while 2 * (rows // n) * lane_width * itemsize > budget:
        if rows % (2 * n) == 0 and (rows // (2 * n)) % 8 == 0 and lane_width % 128 == 0:
            n *= 2
        else:
            break
    return n


def _lane_vectors(d_model: int, lane_width: int):
    """Per-lane frequency a[c] and bias b[c] for the rank-1 decomposition."""
    c = np.arange(lane_width)
    col = c % d_model
    inv_freq = np.exp((col // 2).astype(np.float64)
                      * (-2.0 * math.log(10000.0) / d_model))
    phase = (col % 2).astype(np.float64) * (math.pi / 2.0)   # cos = sin(x+pi/2)
    bias = (c // d_model).astype(np.float64) * inv_freq + phase
    a = jnp.asarray(inv_freq, jnp.float32).reshape(1, lane_width)
    b = jnp.asarray(bias, jnp.float32).reshape(1, lane_width)
    return a, b


# ----------------------------------------------------------------------------
# Table builder
# ----------------------------------------------------------------------------
def build_cosine_pe(d_model: int, max_len: int = 512):
    """Compute the (1, max_len, d_model) positional-encoding table on TPU."""
    assert d_model % 2 == 0, "kernel matches the PyTorch module only for even d_model"
    assert max_len < (1 << 24), "positions must be exactly representable in f32"
    assert max_len * d_model < (1 << 31), "flat table index must fit in int32"

    rows, lane_width = _choose_layout(d_model, max_len)
    pos_per_row = lane_width // d_model
    n_blocks = _choose_num_blocks(rows, lane_width, _num_tensorcores())
    block_rows = rows // n_blocks

    block_bytes = block_rows * lane_width * 4
    vmem_needed = 2 * block_bytes + (1 << 20)   # double-buffered out + headroom
    if vmem_needed > (48 << 20):                # fail loudly (v7x: 64 MiB VMEM)
        raise ValueError(
            f"PE block of {block_bytes} bytes does not fit VMEM for "
            f"max_len={max_len}, d_model={d_model}")
    vmem_limit = max(vmem_needed, 16 << 20)

    a_vec, b_vec = _lane_vectors(d_model, lane_width)

    kernel = functools.partial(
        _cosine_pe_kernel, block_rows=block_rows, pos_per_row=pos_per_row)

    pe2d = pl.pallas_call(
        kernel,
        out_shape=jax.ShapeDtypeStruct((rows, lane_width), jnp.float32),
        grid=(n_blocks,),
        in_specs=[
            pl.BlockSpec((1, lane_width), lambda i: (0, 0)),
            pl.BlockSpec((1, lane_width), lambda i: (0, 0)),
        ],
        out_specs=pl.BlockSpec((block_rows, lane_width), lambda i: (i, 0)),
        compiler_params=pltpu.CompilerParams(
            dimension_semantics=("parallel",),
            vmem_limit_bytes=vmem_limit,
        ),
    )(a_vec, b_vec)

    # Row-major fold back to (max_len, d_model); add the leading batch dim.
    return pe2d.reshape(max_len, d_model)[None, :, :]


# ----------------------------------------------------------------------------
# Module wrapper (matches the PyTorch forward)
# ----------------------------------------------------------------------------
class CosinePositionalEmbedding:
    """JAX/Pallas equivalent of the PyTorch module."""

    def __init__(self, d_model: int, max_len: int = 512):
        # pe[:, 0::2] = sin(pos * div_term); pe[:, 1::2] = cos(pos * div_term)
        # TODO(synk): downstream consumers in bf16 could take a bf16 table /
        # fuse the "x + pe" add; kept f32 to match the PyTorch reference.
        self.weight = build_cosine_pe(d_model, max_len)  # (1, max_len, d_model)

    def __call__(self, x):
        # x: (batch, seq, feature); return weight[:, :seq, :]
        seq_len = x.shape[1]
        return self.weight[:, :seq_len, :]


# ----------------------------------------------------------------------------
# Pure-JAX reference (mirrors the PyTorch __init__)
# ----------------------------------------------------------------------------
def _reference_pe(d_model: int, max_len: int):
    position = jnp.arange(0, max_len, dtype=jnp.float32)[:, None]
    div_term = jnp.exp(
        jnp.arange(0, d_model, 2, dtype=jnp.float32)
        * (-math.log(10000.0) / d_model))
    ang = position * div_term
    pe = jnp.zeros((max_len, d_model), jnp.float32)
    pe = pe.at[:, 0::2].set(jnp.sin(ang))
    pe = pe.at[:, 1::2].set(jnp.cos(ang))
    return pe[None]


if __name__ == "__main__":
    d_model = 32
    max_len = 64
    batch, seq = 2, 8

    key = jax.random.PRNGKey(0)
    x = jax.random.normal(key, (batch, seq, d_model), dtype=jnp.float32)

    module = CosinePositionalEmbedding(d_model, max_len=max_len)
    out = jax.block_until_ready(module(x))

    assert out.shape == (1, seq, d_model), out.shape
    ref = _reference_pe(d_model, max_len)[:, :seq, :]
    assert jnp.allclose(out, ref, atol=1e-5), "mismatch vs reference (sliced)"

    # also check the full table (not just the sliced prefix)
    full = jax.block_until_ready(module.weight)
    assert full.shape == (1, max_len, d_model)
    assert jnp.allclose(full, _reference_pe(d_model, max_len), atol=1e-5), \
        "mismatch vs reference (full table)"

    print("KERNEL_OK")
</pallas_src>

<mosaic_0001>
module attributes {stable_mosaic.version = 11 : i64} {
  func.func @_cosine_pe_kernel(%arg0: i32, %arg1: memref<1x128xf32, #tpu.memory_space<vmem>>, %arg2: memref<1x128xf32, #tpu.memory_space<vmem>>, %arg3: memref<16x128xf32, #tpu.memory_space<vmem>>) attributes {dimension_semantics = [#tpu.dimension_semantics<parallel>], iteration_bounds = array<i64: 1>, scalar_prefetch = 0 : i64, scratch_operands = 0 : i64, tpu.core_type = #tpu.core_type<tc>, window_params = [{pipeline_mode = #tpu.pipeline_mode<synchronous>, transform_indices = @transform_0, window_bounds = array<i64: 1, 128>}, {pipeline_mode = #tpu.pipeline_mode<synchronous>, transform_indices = @transform_1, window_bounds = array<i64: 1, 128>}, {transform_indices = @transform_2, window_bounds = array<i64: 16, 128>}]} {
    %0 = tpu.iota {dimensions = array<i32: 0>} : vector<16x1xi32>
    %c16_i32 = arith.constant 16 : i32
    %1 = arith.muli %arg0, %c16_i32 : i32
    %2 = vector.broadcast %1 : i32 to vector<16x1xi32>
    %3 = arith.addi %2, %0 : vector<16x1xi32>
    %c4_i32 = arith.constant 4 : i32
    %4 = vector.broadcast %c4_i32 : i32 to vector<16x1xi32>
    %5 = arith.muli %3, %4 : vector<16x1xi32>
    %6 = arith.sitofp %5 : vector<16x1xi32> to vector<16x1xf32>
    %c0 = arith.constant 0 : index
    %c0_0 = arith.constant 0 : index
    %7 = vector.load %arg1[%c0, %c0_0] : memref<1x128xf32, #tpu.memory_space<vmem>>, vector<1x128xf32>
    %8 = vector.broadcast %6 : vector<16x1xf32> to vector<16x128xf32>
    %9 = vector.broadcast %7 : vector<1x128xf32> to vector<16x128xf32>
    %10 = arith.mulf %8, %9 : vector<16x128xf32>
    %c0_1 = arith.constant 0 : index
    %c0_2 = arith.constant 0 : index
    %11 = vector.load %arg2[%c0_1, %c0_2] : memref<1x128xf32, #tpu.memory_space<vmem>>, vector<1x128xf32>
    %12 = vector.broadcast %11 : vector<1x128xf32> to vector<16x128xf32>
    %13 = arith.addf %10, %12 : vector<16x128xf32>
    %14 = math.sin %13 : vector<16x128xf32>
    %c0_3 = arith.constant 0 : index
    %c0_4 = arith.constant 0 : index
    %15 = vector.load %arg3[%c0_3, %c0_4] : memref<16x128xf32, #tpu.memory_space<vmem>>, vector<16x128xf32>
    tpu.vector_store %arg3[%c0_3, %c0_4], %14 {strides = array<i32>} : memref<16x128xf32, #tpu.memory_space<vmem>>, vector<16x128xf32>,
    return
  }
  func.func @transform_0(%arg0: i32) -> (i32, i32) {
    %c0_i32 = arith.constant 0 : i32
    %c0_i32_0 = arith.constant 0 : i32
    %c0_i32_1 = arith.constant 0 : i32
    return %c0_i32, %c0_i32_0 : i32, i32
  }
  func.func @transform_1(%arg0: i32) -> (i32, i32) {
    %c0_i32 = arith.constant 0 : i32
    %c0_i32_0 = arith.constant 0 : i32
    %c0_i32_1 = arith.constant 0 : i32
    return %c0_i32, %c0_i32_0 : i32, i32
  }
  func.func @transform_2(%arg0: i32) -> (i32, i32) {
    %c0_i32 = arith.constant 0 : i32
    %c0_i32_0 = arith.constant 0 : i32
    return %arg0, %c0_i32 : i32, i32
  }
}

</mosaic_0001>

<llo_original>
// kernel: tpu_custom_call.1
$region0: #{tpu_custom_call.1}
  #allocation0 [shape = 'u32[]', space=smem, size = 0x4, offset = 0x4, fixed_abs, tag = 'smem constant byte address 0x4 - core index']
  #allocation1 [shape = 'u32[144,128]{1,0:T(1,128)}', space=vmem, size = 0x12000, scoped, tag = 'internal scratch']
  %s0 = inlined_call_operand.hbm [shape: f32[1,128], index: 0, kind: input, shape index: {}]
  %s1 = inlined_call_operand.vmem [shape: f32[1,128], index: 1, kind: input, shape index: {}]
  %s2 = inlined_call_operand.hbm [shape: f32[16,128], index: 2, kind: output, shape index: {}]
  %s3 = sld [smem:[#allocation0]]
  $region22: #{tpu_custom_call.1} parent=0
    _
  %s5 = ssub.s32 1, %s3
  %s6 = scalar_select 0, %s5, %s3
  $region1: #{tpu_custom_call.1} parent=0
    #allocation2 [shape = 'u8[512]{0}', space=vmem, size = 0x400, scoped, tag = 'input window, operand 0, single buffered']
    #allocation3 [shape = 's32[1]{0}', space=sflag, size = 0x4, scoped, tag = 'scoped memory for tpu_custom_call.1']
    #allocation4 [shape = 's32[1]{0}', space=sflag, size = 0x4, scoped, tag = 'scoped memory for tpu_custom_call.1']
    #allocation5 [shape = 'u8[8192]{0}', space=vmem, size = 0x2000, scoped, tag = 'output window, operand 0, single buffered']
    %7 = vsyncpa [#allocation3], 0
    %8 = vsyncpa [#allocation4], 0
    // Predicated region
    $region2: #{tpu_custom_call.1} parent=1 // pred_check
      _
    $region3: #{tpu_custom_call.1} parent=1 // pred_check_branch
      %10 = sbr.rel (0) target = $region5
    $region4: #{tpu_custom_call.1} parent=1 // pred_region
      %s12 = ssub.s32 16, 16
      %13 = vsyncadd [#allocation3], %s12
      %s15 = sshll.u32 [#allocation2], 4
      %s16 = int_to_ptr.vmem [resolvable:$true] %s15
      %18 = dma.hbm_to_vmem [thread:$0]  %s0, 16, %s16, [#allocation3]
    $region5: #{tpu_custom_call.1} parent=1 // pred_fallthru
      _
    // Predicated region
    $region6: #{tpu_custom_call.1} parent=1 // pred_check
      _
    $region7: #{tpu_custom_call.1} parent=1 // pred_check_branch
      %20 = sbr.rel (0) target = $region9
    $region8: #{tpu_custom_call.1} parent=1 // pred_region
      _
    $region9: #{tpu_custom_call.1} parent=1 // pred_fallthru
      _
    // Predicated region
    $region10: #{tpu_custom_call.1} parent=1 // pred_check
      _
    $region11: #{tpu_custom_call.1} parent=1 // pred_check_branch
      %22 = sbr.rel (0) target = $region13
    $region12: #{tpu_custom_call.1} parent=1 // pred_region
      %23 = dma.done [#allocation3], 16
    $region13: #{tpu_custom_call.1} parent=1 // pred_fallthru
      _
    %v24 = vlaneseq
    %v25 = vshrl.u32 %v24, 7
    %v26 = vadd.s32 %v25, 8
    %s27 = smul.u32 0, 16
    %v28 = vstv %s27
    %v29 = vadd.s32 %v28, %v25
    %v30 = vadd.s32 %v28, %v26
    %v31 = vmul.u32 %v29, 4
    %v32 = vmul.u32 %v30, 4
    %v33 = vcvt.s32.f32 %v31
    %v34 = vcvt.s32.f32 %v32
    %v35 = vld [vmem:[#allocation2] sm:$0x1]
    %v37 = vlaneseq
    %v38 = vshrl.u32 %v37, 7
    %v39 = vsub.s32 0, %v38
    %v40 = vrot.slane %v35, %v39
    %v42 = vmul.f32 %v33, %v40
    %v43 = vmul.f32 %v34, %v40
    %v44 = vld [vmem:[%s1] sm:$0x1]
    %v46 = vlaneseq
    %v47 = vshrl.u32 %v46, 7
    %v48 = vsub.s32 0, %v47
    %v49 = vrot.slane %v44, %v48
    %v51 = vadd.f32 %v42, %v49
    %v52 = vadd.f32 %v43, %v49
    %v53 = vand.u32 2147483647, %v51
    %vm54 = vcmp.le.f32.partialorder %v53, 0.7853982
    %vm55 = vcmp.lt.s32.totalorder %v51, 0
    %v56 = vand.u32 %v51, 2139095040
    %v57 = vshrl.u32 %v56, 23
    %v58 = vsub.s32 %v57, 127
    %v59 = vand.u32 2147483647, %v51
    %v60 = vand.u32 %v59, 8388607
    %v61 = vor.u32 %v60, 8388608
    %v62 = vsub.s32 0, %v61
    %v63 = vadd.s32 %v58, 1
    %vm64 = vcmp.gt.s32.totalorder %v63, 0
    %v65 = vsel %vm64, %v63, 0
    %v66 = vshrl.u32 %v65, 5
    %v67 = vand.u32 %v65, 31
    %v68 = vsub.s32 32, %v67
    %v69 = vshrl.u32 683565275, %v68
    %v70 = vshll.u32 683565275, %v67
    %v71 = vshrl.u32 2475754826, %v68
    %v72 = vor.u32 %v70, %v71
    %v73 = vshll.u32 2475754826, %v67
    %v74 = vshrl.u32 2131351028, %v68
    %v75 = vor.u32 %v73, %v74
    %v76 = vshll.u32 2131351028, %v67
    %v77 = vshrl.u32 2102212464, %v68
    %v78 = vor.u32 %v76, %v77
    %v79 = vshll.u32 2102212464, %v67
    %v80 = vshrl.u32 920167782, %v68
    %v81 = vor.u32 %v79, %v80
    %v82 = vshll.u32 920167782, %v67
    %v83 = vshrl.u32 1326507024, %v68
    %v84 = vor.u32 %v82, %v83
    %vm85 = vcmp.lt.s32.totalorder %v66, 1
    %vm86 = vcmp.lt.s32.totalorder %v66, 2
    %vm87 = vcmp.lt.s32.totalorder %v66, 3
    %vm88 = vcmp.lt.s32.totalorder %v66, 4
    %v89 = vsel %vm85, %v69, %v72
    %v90 = vsel %vm88, %v78, 2102212464
    %v91 = vsel %vm87, %v75, %v90
    %v92 = vsel %vm86, %v89, %v91
    %v93 = vsel %vm85, %v72, %v75
    %v94 = vsel %vm88, %v81, 920167782
    %v95 = vsel %vm87, %v78, %v94
    %v96 = vsel %vm86, %v93, %v95
    %v97 = vsel %vm85, %v75, %v78
    %v98 = vsel %vm88, %v84, 1326507024
    %v99 = vsel %vm87, %v81, %v98
    %v100 = vsel %vm86, %v97, %v99
    %v101 = vshll.u32 %v61, 8
    %v102 = vmul.u32.u64.compose %v101, %v100
    %v103 = vextract.low.u32 %v102
    %v104 = vextract.high.u32 %v102
    %v105 = vmul.u32.u64.compose %v101, %v96
    %v106 = vextract.low.u32 %v105
    %v107 = vextract.high.u32 %v105
    %v108 = vmul.u32 %v101, %v92
    %v109 = vadd.s32 %v104, %v106
    %vm110 = vc.u32 %v104, %v106
    %v111 = vadd.s32 %v107, 1
    %v112 = vsel %vm110, %v111, %v107
    %v113 = vadd.s32 %v108, %v112
    %v114 = vadd.s32 %v113, 536870912
    %v115 = vshrl.u32 %v114, 30
    %v116 = vshll.u32 %v115, 30
    %v117 = vsub.s32 %v113, %v116
    %vm118 = vcmp.lt.s32.totalorder %v117, 0
    %v119 = vsub.s32 0, %v117
    %v120 = vsel %vm118, %v119, %v117
    %v121 = vclz %v120
    %v122 = vsub.s32 %v121, 2
    %vm123 = vcmp.gt.s32.totalorder 0, %v122
    %v124 = vsel %vm123, 0, %v122
    %v125 = vsub.s32 32, %v124
    %v126 = vshll.u32 %v117, %v124
    %v127 = vshrl.u32 %v109, %v125
    %v128 = vor.u32 %v126, %v127
    %v129 = vsub.s32 4294967266, %v124
    %v130 = vadd.s32 %v129, 127
    %v131 = vshll.u32 %v130, 23
    %v132 = vor.u32 4788187, %v131
    %v133 = vand.u32 2147483647, %v132
    %v135 = vcvt.s32.f32 %v128
    %v136 = vmul.f32 %v135, %v133
    %v137 = vxor.u32 %v136, 2147483648
    %v138 = vsel %vm55, %v137, %v136
    %v139 = vsub.s32 4, %v115
    %v140 = vsel %vm55, %v139, %v115
    %v141 = vsel %vm54, %v51, %v138
    %v142 = vsel %vm54, 0, %v140
    %v143 = vcosq.f32.pop %v141
    %v144 = vsinq.f32.pop %v141
    %vm145 = vweird.f32 %v51
    %v146 = vadd.s32 %v142, 3
    %v147 = vand.u32 %v146, 3
    %vm148 = vcmp.lt.s32.totalorder %v147, 2
    %vm149 = vcmp.eq.s32.totalorder %v147, 0
    %v150 = vxor.u32 %v144, 2147483648
    %v151 = vsel %vm149, %v143, %v150
    %vm152 = vcmp.eq.s32.totalorder %v147, 2
    %v153 = vxor.u32 %v143, 2147483648
    %v154 = vsel %vm152, %v153, %v144
    %v155 = vsel %vm148, %v151, %v154
    %v156 = vsel %vm145, nan, %v155
    %v157 = vand.u32 2147483647, %v52
    %vm158 = vcmp.le.f32.partialorder %v157, 0.7853982
    %vm159 = vcmp.lt.s32.totalorder %v52, 0
    %v160 = vand.u32 %v52, 2139095040
    %v161 = vshrl.u32 %v160, 23
    %v162 = vsub.s32 %v161, 127
    %v163 = vand.u32 2147483647, %v52
    %v164 = vand.u32 %v163, 8388607
    %v165 = vor.u32 %v164, 8388608
    %v166 = vsub.s32 0, %v165
    %v167 = vadd.s32 %v162, 1
    %vm168 = vcmp.gt.s32.totalorder %v167, 0
    %v169 = vsel %vm168, %v167, 0
    %v170 = vshrl.u32 %v169, 5
    %v171 = vand.u32 %v169, 31
    %v172 = vsub.s32 32, %v171
    %v173 = vshrl.u32 683565275, %v172
    %v174 = vshll.u32 683565275, %v171
    %v175 = vshrl.u32 2475754826, %v172
    %v176 = vor.u32 %v174, %v175
    %v177 = vshll.u32 2475754826, %v171
    %v178 = vshrl.u32 2131351028, %v172
    %v179 = vor.u32 %v177, %v178
    %v180 = vshll.u32 2131351028, %v171
    %v181 = vshrl.u32 2102212464, %v172
    %v182 = vor.u32 %v180, %v181
    %v183 = vshll.u32 2102212464, %v171
    %v184 = vshrl.u32 920167782, %v172
    %v185 = vor.u32 %v183, %v184
    %v186 = vshll.u32 920167782, %v171
    %v187 = vshrl.u32 1326507024, %v172
    %v188 = vor.u32 %v186, %v187
    %vm189 = vcmp.lt.s32.totalorder %v170, 1
    %vm190 = vcmp.lt.s32.totalorder %v170, 2
    %vm191 = vcmp.lt.s32.totalorder %v170, 3
    %vm192 = vcmp.lt.s32.totalorder %v170, 4
    %v193 = vsel %vm189, %v173, %v176
    %v194 = vsel %vm192, %v182, 2102212464
    %v195 = vsel %vm191, %v179, %v194
    %v196 = vsel %vm190, %v193, %v195
    %v197 = vsel %vm189, %v176, %v179
    %v198 = vsel %vm192, %v185, 920167782
    %v199 = vsel %vm191, %v182, %v198
    %v200 = vsel %vm190, %v197, %v199
    %v201 = vsel %vm189, %v179, %v182
    %v202 = vsel %vm192, %v188, 1326507024
    %v203 = vsel %vm191, %v185, %v202
    %v204 = vsel %vm190, %v201, %v203
    %v205 = vshll.u32 %v165, 8
    %v206 = vmul.u32.u64.compose %v205, %v204
    %v207 = vextract.low.u32 %v206
    %v208 = vextract.high.u32 %v206
    %v209 = vmul.u32.u64.compose %v205, %v200
    %v210 = vextract.low.u32 %v209
    %v211 = vextract.high.u32 %v209
    %v212 = vmul.u32 %v205, %v196
    %v213 = vadd.s32 %v208, %v210
    %vm214 = vc.u32 %v208, %v210
    %v215 = vadd.s32 %v211, 1
    %v216 = vsel %vm214, %v215, %v211
    %v217 = vadd.s32 %v212, %v216
    %v218 = vadd.s32 %v217, 536870912
    %v219 = vshrl.u32 %v218, 30
    %v220 = vshll.u32 %v219, 30
    %v221 = vsub.s32 %v217, %v220
    %vm222 = vcmp.lt.s32.totalorder %v221, 0
    %v223 = vsub.s32 0, %v221
    %v224 = vsel %vm222, %v223, %v221
    %v225 = vclz %v224
    %v226 = vsub.s32 %v225, 2
    %vm227 = vcmp.gt.s32.totalorder 0, %v226
    %v228 = vsel %vm227, 0, %v226
    %v229 = vsub.s32 32, %v228
    %v230 = vshll.u32 %v221, %v228
    %v231 = vshrl.u32 %v213, %v229
    %v232 = vor.u32 %v230, %v231
    %v233 = vsub.s32 4294967266, %v228
    %v234 = vadd.s32 %v233, 127
    %v235 = vshll.u32 %v234, 23
    %v236 = vor.u32 4788187, %v235
    %v237 = vand.u32 2147483647, %v236
    %v239 = vcvt.s32.f32 %v232
    %v240 = vmul.f32 %v239, %v237
    %v241 = vxor.u32 %v240, 2147483648
    %v242 = vsel %vm159, %v241, %v240
    %v243 = vsub.s32 4, %v219
    %v244 = vsel %vm159, %v243, %v219
    %v245 = vsel %vm158, %v52, %v242
    %v246 = vsel %vm158, 0, %v244
    %v247 = vcosq.f32.pop %v245
    %v248 = vsinq.f32.pop %v245
    %vm249 = vweird.f32 %v52
    %v250 = vadd.s32 %v246, 3
    %v251 = vand.u32 %v250, 3
    %vm252 = vcmp.lt.s32.totalorder %v251, 2
    %vm253 = vcmp.eq.s32.totalorder %v251, 0
    %v254 = vxor.u32 %v248, 2147483648
    %v255 = vsel %vm253, %v247, %v254
    %vm256 = vcmp.eq.s32.totalorder %v251, 2
    %v257 = vxor.u32 %v247, 2147483648
    %v258 = vsel %vm256, %v257, %v248
    %v259 = vsel %vm252, %v255, %v258
    %v260 = vsel %vm249, nan, %v259
    %261 = vst [vmem:[#allocation5] sm:$0xff] %v156
    %262 = vst [vmem:[#allocation5 + $0x8] sm:$0xff] %v260
    // Predicated region
    $region14: #{tpu_custom_call.1} parent=1 // pred_check
      _
    $region15: #{tpu_custom_call.1} parent=1 // pred_check_branch
      %264 = sbr.rel (0) target = $region17
    $region16: #{tpu_custom_call.1} parent=1 // pred_region
      %s266 = ssub.s32 256, 256
      %267 = vsyncadd [#allocation4], %s266
      %s268 = sshll.u32 [#allocation5], 4
      %s269 = int_to_ptr.vmem [resolvable:$true] %s268
      %274 = dma.vmem_to_hbm [thread:$0]  %s269, 256, %s2, [#allocation4], 128, 128, 8
    $region17: #{tpu_custom_call.1} parent=1 // pred_fallthru
      _
    // Predicated region
    $region18: #{tpu_custom_call.1} parent=1 // pred_check
      _
    $region19: #{tpu_custom_call.1} parent=1 // pred_check_branch
      %276 = sbr.rel (0) target = $region21
    $region20: #{tpu_custom_call.1} parent=1 // pred_region
      %277 = dma.done [#allocation4], 256
    $region21: #{tpu_custom_call.1} parent=1 // pred_fallthru
      _
    %278 = vsyncpa [#allocation3], 1
    %279 = vsyncpa [#allocation4], 1

</llo_original>
